<compile_context>
chip_gen: v5e
topology: v5e:2x2
jax: 0.10.0
libtpu: 0.0.40
codegen_flags: <defaults>
</compile_context>

<pallas_src>
import functools

import jax
import jax.numpy as jnp
from jax.experimental import pallas as pl
from jax.experimental.pallas import tpu as pltpu


def _s2v_kernel(T, D, H,
                xv_ref, q2_ref, a_ref, mu3_ref,
                wD_ref, wH_ref, bD_ref, bH_ref,
                out_ref):
    """One grid step == one graph of the batch."""
    f32, bf16 = jnp.float32, jnp.bfloat16
    relu = lambda x: jnp.maximum(x, 0.0)
    dot = lambda a, b: jnp.dot(a, b, preferred_element_type=f32)

    n = out_ref.shape[1] - 1          # number of nodes N
    fp = xv_ref.shape[2]              # padded node-feature size Fp

    # --- static slices of the consolidated bf16 weight slabs (MXU operands) ---
    w_mu1 = wD_ref[0:fp, :]                    # (Fp, D)  == padded mu_1
    w_mu2 = wD_ref[fp:fp + D, :]               # (D, D)   == mu_2.weight.T
    w_q1 = wD_ref[fp + D:fp + 2 * D, :]        # (D, D)   == q_1.weight.T
    w_qra = wH_ref[0:D, :]                     # (D, H)   == q_reg.weight.T[:D]
    w_qrb = wH_ref[D:2 * D, :]                 # (D, H)   == q_reg.weight.T[D:]

    # --- f32 bias slab rows ---
    b_mu2 = bD_ref[0:1, :]                     # (1, D)
    b_q1 = bD_ref[1:2, :]                      # (1, D)
    b_qr = bH_ref[0:1, :]                      # (1, H)
    w_qrow = bH_ref[1:2, :]                    # (1, H)   == q.weight row
    b_q = bH_ref[2:3, :][:, 0:1]               # (1, 1)   == q.bias

    xv = xv_ref[0]                             # (N, Fp) bf16
    A = a_ref[...]                             # (N, N)  bf16 (binary, exact)

    # seed embedding (constant over T) and constant additive term for every round
    mu1 = relu(dot(xv, w_mu1))                 # (N, D) f32
    base = mu1 + mu3_ref[...] + b_mu2          # (N, D) f32

    # T rounds of message passing with the shared (N, N) adjacency
    mu = mu1
    for _ in range(1, T):
        pooled = dot(A, mu.astype(bf16))                       # (N, D) f32
        mu = relu(dot(pooled.astype(bf16), w_mu2) + base)      # (N, D) f32

    # graph mean embedding (sublane reduction) -> q_1
    mu_mean = jnp.sum(mu, axis=0, keepdims=True) * (1.0 / n)   # (1, D)
    mu_mean = relu(dot(mu_mean.astype(bf16), w_q1) + b_q1)     # (1, D)

    # q_2(option) contribution, identical for every row of this graph
    q2 = q2_ref[0]                                             # (1, D) f32
    const_h = dot(q2.astype(bf16), w_qrb) + b_qr               # (1, H)

    # q_reg / q epilogue: node rows and mean row separately (no sublane concat)
    h_nodes = relu(dot(mu.astype(bf16), w_qra) + const_h)      # (N, H)
    h_mean = relu(dot(mu_mean.astype(bf16), w_qra) + const_h)  # (1, H)

    q_nodes = jnp.sum(h_nodes * w_qrow, axis=-1, keepdims=True) + b_q   # (N, 1)
    q_mean = jnp.sum(h_mean * w_qrow, axis=-1, keepdims=True) + b_q     # (1, 1)

    out_ref[0, :n, :] = q_nodes
    out_ref[0, n:, :] = q_mean


def init_params(key, F, D, H):
    """Deterministic synthetic weights (PyTorch orientation: Linear weight is (out, in))."""
    ks = jax.random.split(key, 15)
    std = 0.01
    n = lambda k, s: std * jax.random.normal(k, s, jnp.float32)
    return {
        "mu_1": n(ks[0], (F, D)),
        "mu_2_w": n(ks[1], (D, D)), "mu_2_b": n(ks[2], (D,)),
        "mu_3_w": n(ks[3], (D, D)), "mu_3_b": n(ks[4], (D,)),
        "mu_4_w": n(ks[5], (D, 1)), "mu_4_b": n(ks[6], (D,)),
        "q_1_w": n(ks[7], (D, D)), "q_1_b": n(ks[8], (D,)),
        "q_2_w": n(ks[9], (D, 1)), "q_2_b": n(ks[10], (D,)),
        "q_reg_w": n(ks[11], (H, 2 * D)), "q_reg_b": n(ks[12], (H,)),
        "q_w": n(ks[13], (1, H)), "q_b": n(ks[14], (1,)),
    }


def s2v_forward(params, xv, option, adj, mask=None, T=4):
    B, N, F = xv.shape
    D = params["mu_1"].shape[1]
    H = params["q_reg_w"].shape[0]
    f32, bf16 = jnp.float32, jnp.bfloat16
    hp = jax.lax.Precision.HIGHEST

    xv = xv.astype(f32)
    adj = adj.astype(f32)
    option = option.reshape(B, 1).astype(f32)

    # ---- constant / layout glue (cheap XLA ops, shared across batch and rounds) ----
    Fp = ((F + 7) // 8) * 8                                         # 8-align the tiny F axis
    xv_p = jnp.pad(xv, ((0, 0), (0, 0), (0, Fp - F))).astype(bf16)  # (B, N, Fp) bf16
    A = (adj > 0).astype(bf16)                                      # (N, N) binary -> exact bf16

    # edge term mu_3: depends only on adj & mu_3/mu_4 weights; constant over T and batch
    mu4_sum = jnp.maximum(
        adj[:, :, None] * params["mu_4_w"][:, 0] + params["mu_4_b"], 0.0).sum(axis=1)
    mu3 = jnp.dot(mu4_sum, params["mu_3_w"].T, precision=hp) + params["mu_3_b"]   # (N, D)
    mu3 = mu3.astype(f32)

    # q_2(option) row per graph: option * W_q2 + b_q2
    q2_rows = (option.reshape(B, 1, 1) * params["q_2_w"][:, 0].reshape(1, 1, D)
               + params["q_2_b"].reshape(1, 1, D)).astype(f32)      # (B, 1, D)

    # consolidated weight slabs (bf16 MXU operands) and bias slabs (f32)
    mu1_pad = jnp.zeros((Fp, D), f32).at[:F, :].set(params["mu_1"])
    wD = jnp.concatenate(
        [mu1_pad, params["mu_2_w"].T, params["q_1_w"].T], axis=0).astype(bf16)    # (Fp+2D, D)
    wH = params["q_reg_w"].T.astype(bf16)                           # (2D, H)
    bD = jnp.stack([params["mu_2_b"], params["q_1_b"]], axis=0).astype(f32)       # (2, D)
    bH = jnp.stack([params["q_reg_b"], params["q_w"][0],
                    jnp.full((H,), params["q_b"][0], f32)], axis=0).astype(f32)   # (3, H)

    kernel = functools.partial(_s2v_kernel, T, D, H)
    q = pl.pallas_call(
        kernel,
        out_shape=jax.ShapeDtypeStruct((B, N + 1, 1), f32),
        grid=(B,),
        in_specs=[
            pl.BlockSpec((1, N, Fp), lambda b: (b, 0, 0)),          # xv     (per graph)
            pl.BlockSpec((1, 1, D), lambda b: (b, 0, 0)),           # q_2    (per graph)
            pl.BlockSpec((N, N), lambda b: (0, 0)),                 # shared adjacency
            pl.BlockSpec((N, D), lambda b: (0, 0)),                 # shared mu_3 term
            pl.BlockSpec((Fp + 2 * D, D), lambda b: (0, 0)),        # bf16 weight slab (D cols)
            pl.BlockSpec((2 * D, H), lambda b: (0, 0)),             # bf16 weight slab (H cols)
            pl.BlockSpec((2, D), lambda b: (0, 0)),                 # f32 bias slab (D cols)
            pl.BlockSpec((3, H), lambda b: (0, 0)),                 # f32 bias slab (H cols)
        ],
        out_specs=pl.BlockSpec((1, N + 1, 1), lambda b: (b, 0, 0)),
        compiler_params=pltpu.CompilerParams(
            dimension_semantics=("parallel",)),
    )(xv_p, q2_rows, A, mu3, wD, wH, bD, bH)

    if mask is not None:  # glue: the PyTorch code overwrites masked entries with -99999
        m = jnp.asarray(mask, f32).reshape(B, -1, 1)
        assert m.shape[1] == N + 1, "mask must cover N+1 rows (nodes + mean row)"
        q = jnp.where(m == 1, -99999.0, q)
    return q


def s2v_reference(params, xv, option, adj, T=4):
    """Pure-JAX mirror of the PyTorch forward (weighted_edge=True, no pre/post pooling)."""
    B, N, _ = xv.shape
    hp = jax.lax.Precision.HIGHEST
    relu = lambda x: jnp.maximum(x, 0.0)
    lin = lambda x, w, b: jnp.matmul(x, w.T, precision=hp) + b
    A = (adj > 0).astype(jnp.float32)          # (N, N)
    W = adj[..., None]                         # (N, N, 1)
    mu = None
    for t in range(T):
        mu_1 = relu(jnp.einsum("bnf,fd->bnd", xv, params["mu_1"], precision=hp))
        if t == 0:
            mu = mu_1
        else:
            mu_pool = jnp.einsum("nm,bmd->bnd", A, mu, precision=hp)
            mu_2 = lin(mu_pool, params["mu_2_w"], params["mu_2_b"])
            mu_4 = relu(lin(W, params["mu_4_w"], params["mu_4_b"])).sum(axis=1)[None]
            mu_3 = lin(mu_4, params["mu_3_w"], params["mu_3_b"])
            mu = relu(mu_1 + mu_2 + mu_3)
    mu_mean = relu(lin(mu.mean(axis=1, keepdims=True), params["q_1_w"], params["q_1_b"]))
    mu_aug = jnp.concatenate([mu, mu_mean], axis=1)                   # (B, N+1, D)
    q_2 = lin(option.reshape(B, 1, 1), params["q_2_w"], params["q_2_b"])
    q_2 = jnp.broadcast_to(q_2, (B, N + 1, params["mu_1"].shape[1]))
    q_ = jnp.concatenate([mu_aug, q_2], axis=-1)
    q_reg = relu(lin(q_, params["q_reg_w"], params["q_reg_b"]))
    return lin(q_reg, params["q_w"], params["q_b"])


if __name__ == "__main__":
    B, N, F, D, H, T = 2, 8, 4, 32, 32, 4
    key = jax.random.PRNGKey(0)
    k_xv, k_w, k_keep, k_opt, k_par = jax.random.split(key, 5)

    xv = jax.random.normal(k_xv, (B, N, F), jnp.float32)
    weights = jax.random.uniform(k_w, (N, N), jnp.float32)
    keep = (jax.random.uniform(k_keep, (N, N)) > 0.5).astype(jnp.float32)
    adj = weights * keep                       # weighted adjacency with some zero edges
    option = jax.random.normal(k_opt, (B, 1), jnp.float32)
    params = init_params(k_par, F, D, H)

    q = s2v_forward(params, xv, option, adj, T=T)
    q = jax.block_until_ready(q)

    q_ref = s2v_reference(params, xv, option, adj, T=T)
    assert q.shape == (B, N + 1, 1)
    if not jnp.allclose(q, q_ref, atol=1e-3, rtol=2e-2):
        err = float(jnp.max(jnp.abs(q - q_ref)))
        raise AssertionError(
            f"Pallas kernel does not match JAX reference (max abs err {err})")
    print("KERNEL_OK")
</pallas_src>

<mosaic_0001>
module attributes {stable_mosaic.version = 11 : i64} {
  func.func @_s2v_kernel(%arg0: i32, %arg1: memref<1x8x8xbf16, #tpu.memory_space<vmem>>, %arg2: memref<1x1x32xf32, #tpu.memory_space<vmem>>, %arg3: memref<8x8xbf16, #tpu.memory_space<vmem>>, %arg4: memref<8x32xf32, #tpu.memory_space<vmem>>, %arg5: memref<72x32xbf16, #tpu.memory_space<vmem>>, %arg6: memref<64x32xbf16, #tpu.memory_space<vmem>>, %arg7: memref<2x32xf32, #tpu.memory_space<vmem>>, %arg8: memref<3x32xf32, #tpu.memory_space<vmem>>, %arg9: memref<1x9x1xf32, #tpu.memory_space<vmem>>) attributes {dimension_semantics = [#tpu.dimension_semantics<parallel>], iteration_bounds = array<i64: 2>, scalar_prefetch = 0 : i64, scratch_operands = 0 : i64, tpu.core_type = #tpu.core_type<tc>, window_params = [{transform_indices = @transform_0, window_bounds = array<i64: 1, 8, 8>}, {transform_indices = @transform_1, window_bounds = array<i64: 1, 1, 32>}, {pipeline_mode = #tpu.pipeline_mode<synchronous>, transform_indices = @transform_2, window_bounds = array<i64: 8, 8>}, {pipeline_mode = #tpu.pipeline_mode<synchronous>, transform_indices = @transform_3, window_bounds = array<i64: 8, 32>}, {pipeline_mode = #tpu.pipeline_mode<synchronous>, transform_indices = @transform_4, window_bounds = array<i64: 72, 32>}, {pipeline_mode = #tpu.pipeline_mode<synchronous>, transform_indices = @transform_5, window_bounds = array<i64: 64, 32>}, {pipeline_mode = #tpu.pipeline_mode<synchronous>, transform_indices = @transform_6, window_bounds = array<i64: 2, 32>}, {pipeline_mode = #tpu.pipeline_mode<synchronous>, transform_indices = @transform_7, window_bounds = array<i64: 3, 32>}, {transform_indices = @transform_8, window_bounds = array<i64: 1, 9, 1>}]} {
    %c0 = arith.constant 0 : index
    %c0_0 = arith.constant 0 : index
    %0 = vector.load %arg5[%c0, %c0_0] : memref<72x32xbf16, #tpu.memory_space<vmem>>, vector<8x32xbf16>
    %c8 = arith.constant 8 : index
    %c0_1 = arith.constant 0 : index
    %1 = vector.load %arg5[%c8, %c0_1] : memref<72x32xbf16, #tpu.memory_space<vmem>>, vector<32x32xbf16>
    %c40 = arith.constant 40 : index
    %c0_2 = arith.constant 0 : index
    %2 = vector.load %arg5[%c40, %c0_2] : memref<72x32xbf16, #tpu.memory_space<vmem>>, vector<32x32xbf16>
    %c0_3 = arith.constant 0 : index
    %c0_4 = arith.constant 0 : index
    %3 = vector.load %arg6[%c0_3, %c0_4] : memref<64x32xbf16, #tpu.memory_space<vmem>>, vector<32x32xbf16>
    %c32 = arith.constant 32 : index
    %c0_5 = arith.constant 0 : index
    %4 = vector.load %arg6[%c32, %c0_5] : memref<64x32xbf16, #tpu.memory_space<vmem>>, vector<32x32xbf16>
    %c0_6 = arith.constant 0 : index
    %c0_7 = arith.constant 0 : index
    %5 = vector.load %arg7[%c0_6, %c0_7] : memref<2x32xf32, #tpu.memory_space<vmem>>, vector<1x32xf32>
    %c1 = arith.constant 1 : index
    %c0_8 = arith.constant 0 : index
    %6 = vector.load %arg7[%c1, %c0_8] : memref<2x32xf32, #tpu.memory_space<vmem>>, vector<1x32xf32>
    %c0_9 = arith.constant 0 : index
    %c0_10 = arith.constant 0 : index
    %7 = vector.load %arg8[%c0_9, %c0_10] : memref<3x32xf32, #tpu.memory_space<vmem>>, vector<1x32xf32>
    %c1_11 = arith.constant 1 : index
    %c0_12 = arith.constant 0 : index
    %8 = vector.load %arg8[%c1_11, %c0_12] : memref<3x32xf32, #tpu.memory_space<vmem>>, vector<1x32xf32>
    %c2 = arith.constant 2 : index
    %c0_13 = arith.constant 0 : index
    %9 = vector.load %arg8[%c2, %c0_13] : memref<3x32xf32, #tpu.memory_space<vmem>>, vector<1x32xf32>
    %10 = vector.extract_strided_slice %9 {offsets = [0, 0], sizes = [1, 1], strides = [1, 1]} : vector<1x32xf32> to vector<1x1xf32>
    %c0_14 = arith.constant 0 : index
    %c0_15 = arith.constant 0 : index
    %c0_16 = arith.constant 0 : index
    %11 = vector.load %arg1[%c0_14, %c0_15, %c0_16] : memref<1x8x8xbf16, #tpu.memory_space<vmem>>, vector<1x8x8xbf16>
    %12 = vector.shape_cast %11 : vector<1x8x8xbf16> to vector<8x8xbf16>
    %c0_17 = arith.constant 0 : index
    %c0_18 = arith.constant 0 : index
    %13 = vector.load %arg3[%c0_17, %c0_18] : memref<8x8xbf16, #tpu.memory_space<vmem>>, vector<8x8xbf16>
    %cst = arith.constant dense<0.000000e+00> : vector<8x32xf32>
    %14 = tpu.matmul %12, %0, %cst {dimension_numbers = #tpu.dot_dimension_numbers<[1], [0], [0], [1], [0, 0, 1, 1], [], []>} : vector<8x8xbf16>, vector<8x32xbf16>, vector<8x32xf32> -> vector<8x32xf32>
    %cst_19 = arith.constant 0.000000e+00 : f32
    %15 = vector.broadcast %cst_19 : f32 to vector<8x32xf32>
    %16 = arith.maximumf %14, %15 : vector<8x32xf32>
    %c0_20 = arith.constant 0 : index
    %c0_21 = arith.constant 0 : index
    %17 = vector.load %arg4[%c0_20, %c0_21] : memref<8x32xf32, #tpu.memory_space<vmem>>, vector<8x32xf32>
    %18 = arith.addf %16, %17 : vector<8x32xf32>
    %19 = vector.broadcast %5 : vector<1x32xf32> to vector<8x32xf32>
    %20 = arith.addf %18, %19 : vector<8x32xf32>
    %21 = arith.truncf %16 : vector<8x32xf32> to vector<8x32xbf16>
    %cst_22 = arith.constant dense<0.000000e+00> : vector<8x32xf32>
    %22 = tpu.matmul %13, %21, %cst_22 {dimension_numbers = #tpu.dot_dimension_numbers<[1], [0], [0], [1], [0, 0, 1, 1], [], []>} : vector<8x8xbf16>, vector<8x32xbf16>, vector<8x32xf32> -> vector<8x32xf32>
    %23 = arith.truncf %22 : vector<8x32xf32> to vector<8x32xbf16>
    %cst_23 = arith.constant dense<0.000000e+00> : vector<8x32xf32>
    %24 = tpu.matmul %23, %1, %cst_23 {dimension_numbers = #tpu.dot_dimension_numbers<[1], [0], [0], [1], [0, 0, 1, 1], [], []>} : vector<8x32xbf16>, vector<32x32xbf16>, vector<8x32xf32> -> vector<8x32xf32>
    %25 = arith.addf %24, %20 : vector<8x32xf32>
    %cst_24 = arith.constant 0.000000e+00 : f32
    %26 = vector.broadcast %cst_24 : f32 to vector<8x32xf32>
    %27 = arith.maximumf %25, %26 : vector<8x32xf32>
    %28 = arith.truncf %27 : vector<8x32xf32> to vector<8x32xbf16>
    %cst_25 = arith.constant dense<0.000000e+00> : vector<8x32xf32>
    %29 = tpu.matmul %13, %28, %cst_25 {dimension_numbers = #tpu.dot_dimension_numbers<[1], [0], [0], [1], [0, 0, 1, 1], [], []>} : vector<8x8xbf16>, vector<8x32xbf16>, vector<8x32xf32> -> vector<8x32xf32>
    %30 = arith.truncf %29 : vector<8x32xf32> to vector<8x32xbf16>
    %cst_26 = arith.constant dense<0.000000e+00> : vector<8x32xf32>
    %31 = tpu.matmul %30, %1, %cst_26 {dimension_numbers = #tpu.dot_dimension_numbers<[1], [0], [0], [1], [0, 0, 1, 1], [], []>} : vector<8x32xbf16>, vector<32x32xbf16>, vector<8x32xf32> -> vector<8x32xf32>
    %32 = arith.addf %31, %20 : vector<8x32xf32>
    %cst_27 = arith.constant 0.000000e+00 : f32
    %33 = vector.broadcast %cst_27 : f32 to vector<8x32xf32>
    %34 = arith.maximumf %32, %33 : vector<8x32xf32>
    %35 = arith.truncf %34 : vector<8x32xf32> to vector<8x32xbf16>
    %cst_28 = arith.constant dense<0.000000e+00> : vector<8x32xf32>
    %36 = tpu.matmul %13, %35, %cst_28 {dimension_numbers = #tpu.dot_dimension_numbers<[1], [0], [0], [1], [0, 0, 1, 1], [], []>} : vector<8x8xbf16>, vector<8x32xbf16>, vector<8x32xf32> -> vector<8x32xf32>
    %37 = arith.truncf %36 : vector<8x32xf32> to vector<8x32xbf16>
    %cst_29 = arith.constant dense<0.000000e+00> : vector<8x32xf32>
    %38 = tpu.matmul %37, %1, %cst_29 {dimension_numbers = #tpu.dot_dimension_numbers<[1], [0], [0], [1], [0, 0, 1, 1], [], []>} : vector<8x32xbf16>, vector<32x32xbf16>, vector<8x32xf32> -> vector<8x32xf32>
    %39 = arith.addf %38, %20 : vector<8x32xf32>
    %cst_30 = arith.constant 0.000000e+00 : f32
    %40 = vector.broadcast %cst_30 : f32 to vector<8x32xf32>
    %41 = arith.maximumf %39, %40 : vector<8x32xf32>
    %cst_31 = arith.constant dense<0.000000e+00> : vector<32xf32>
    %42 = vector.multi_reduction <add>, %41, %cst_31 [0] : vector<8x32xf32> to vector<32xf32>
    %43 = vector.shape_cast %42 : vector<32xf32> to vector<1x32xf32>
    %cst_32 = arith.constant 1.250000e-01 : f32
    %44 = vector.broadcast %cst_32 : f32 to vector<1x32xf32>
    %45 = arith.mulf %43, %44 : vector<1x32xf32>
    %46 = arith.truncf %45 : vector<1x32xf32> to vector<1x32xbf16>
    %cst_33 = arith.constant dense<0.000000e+00> : vector<1x32xf32>
    %47 = tpu.matmul %46, %2, %cst_33 {dimension_numbers = #tpu.dot_dimension_numbers<[1], [0], [0], [1], [0, 0, 1, 1], [], []>} : vector<1x32xbf16>, vector<32x32xbf16>, vector<1x32xf32> -> vector<1x32xf32>
    %48 = arith.addf %47, %6 : vector<1x32xf32>
    %cst_34 = arith.constant 0.000000e+00 : f32
    %49 = vector.broadcast %cst_34 : f32 to vector<1x32xf32>
    %50 = arith.maximumf %48, %49 : vector<1x32xf32>
    %c0_35 = arith.constant 0 : index
    %c0_36 = arith.constant 0 : index
    %c0_37 = arith.constant 0 : index
    %51 = vector.load %arg2[%c0_35, %c0_36, %c0_37] : memref<1x1x32xf32, #tpu.memory_space<vmem>>, vector<1x1x32xf32>
    %52 = vector.shape_cast %51 : vector<1x1x32xf32> to vector<1x32xf32>
    %53 = arith.truncf %52 : vector<1x32xf32> to vector<1x32xbf16>
    %cst_38 = arith.constant dense<0.000000e+00> : vector<1x32xf32>
    %54 = tpu.matmul %53, %4, %cst_38 {dimension_numbers = #tpu.dot_dimension_numbers<[1], [0], [0], [1], [0, 0, 1, 1], [], []>} : vector<1x32xbf16>, vector<32x32xbf16>, vector<1x32xf32> -> vector<1x32xf32>
    %55 = arith.addf %54, %7 : vector<1x32xf32>
    %56 = arith.truncf %41 : vector<8x32xf32> to vector<8x32xbf16>
    %cst_39 = arith.constant dense<0.000000e+00> : vector<8x32xf32>
    %57 = tpu.matmul %56, %3, %cst_39 {dimension_numbers = #tpu.dot_dimension_numbers<[1], [0], [0], [1], [0, 0, 1, 1], [], []>} : vector<8x32xbf16>, vector<32x32xbf16>, vector<8x32xf32> -> vector<8x32xf32>
    %58 = vector.broadcast %55 : vector<1x32xf32> to vector<8x32xf32>
    %59 = arith.addf %57, %58 : vector<8x32xf32>
    %cst_40 = arith.constant 0.000000e+00 : f32
    %60 = vector.broadcast %cst_40 : f32 to vector<8x32xf32>
    %61 = arith.maximumf %59, %60 : vector<8x32xf32>
    %62 = arith.truncf %50 : vector<1x32xf32> to vector<1x32xbf16>
    %cst_41 = arith.constant dense<0.000000e+00> : vector<1x32xf32>
    %63 = tpu.matmul %62, %3, %cst_41 {dimension_numbers = #tpu.dot_dimension_numbers<[1], [0], [0], [1], [0, 0, 1, 1], [], []>} : vector<1x32xbf16>, vector<32x32xbf16>, vector<1x32xf32> -> vector<1x32xf32>
    %64 = arith.addf %63, %55 : vector<1x32xf32>
    %cst_42 = arith.constant 0.000000e+00 : f32
    %65 = vector.broadcast %cst_42 : f32 to vector<1x32xf32>
    %66 = arith.maximumf %64, %65 : vector<1x32xf32>
    %67 = vector.broadcast %8 : vector<1x32xf32> to vector<8x32xf32>
    %68 = arith.mulf %61, %67 : vector<8x32xf32>
    %cst_43 = arith.constant dense<0.000000e+00> : vector<8xf32>
    %69 = vector.multi_reduction <add>, %68, %cst_43 [1] : vector<8x32xf32> to vector<8xf32>
    %70 = vector.shape_cast %69 : vector<8xf32> to vector<8x1xf32>
    %71 = vector.broadcast %10 : vector<1x1xf32> to vector<8x1xf32>
    %72 = arith.addf %70, %71 : vector<8x1xf32>
    %73 = arith.mulf %66, %8 : vector<1x32xf32>
    %cst_44 = arith.constant dense<0.000000e+00> : vector<1xf32>
    %74 = vector.multi_reduction <add>, %73, %cst_44 [1] : vector<1x32xf32> to vector<1xf32>
    %75 = vector.shape_cast %74 : vector<1xf32> to vector<1x1xf32>
    %76 = arith.addf %75, %10 : vector<1x1xf32>
    %c0_45 = arith.constant 0 : index
    %c0_46 = arith.constant 0 : index
    %c0_47 = arith.constant 0 : index
    %77 = vector.load %arg9[%c0_45, %c0_46, %c0_47] : memref<1x9x1xf32, #tpu.memory_space<vmem>>, vector<1x8x1xf32>
    %78 = vector.shape_cast %77 : vector<1x8x1xf32> to vector<8x1xf32>
    %79 = vector.shape_cast %72 : vector<8x1xf32> to vector<1x8x1xf32>
    tpu.vector_store %arg9[%c0_45, %c0_46, %c0_47], %79 {strides = array<i32>} : memref<1x9x1xf32, #tpu.memory_space<vmem>>, vector<1x8x1xf32>,
    %c0_48 = arith.constant 0 : index
    %c8_49 = arith.constant 8 : index
    %c0_50 = arith.constant 0 : index
    %80 = vector.load %arg9[%c0_48, %c8_49, %c0_50] : memref<1x9x1xf32, #tpu.memory_space<vmem>>, vector<1x1x1xf32>
    %81 = vector.shape_cast %80 : vector<1x1x1xf32> to vector<1x1xf32>
    %82 = vector.shape_cast %76 : vector<1x1xf32> to vector<1x1x1xf32>
    tpu.vector_store %arg9[%c0_48, %c8_49, %c0_50], %82 {strides = array<i32>} : memref<1x9x1xf32, #tpu.memory_space<vmem>>, vector<1x1x1xf32>,
    return
  }
  func.func @transform_0(%arg0: i32) -> (i32, i32, i32) {
    %c0_i32 = arith.constant 0 : i32
    %c0_i32_0 = arith.constant 0 : i32
    %c0_i32_1 = arith.constant 0 : i32
    return %arg0, %c0_i32, %c0_i32_0 : i32, i32, i32
  }
  func.func @transform_1(%arg0: i32) -> (i32, i32, i32) {
    %c0_i32 = arith.constant 0 : i32
    %c0_i32_0 = arith.constant 0 : i32
    %c0_i32_1 = arith.constant 0 : i32
    return %arg0, %c0_i32, %c0_i32_0 : i32, i32, i32
  }
  func.func @transform_2(%arg0: i32) -> (i32, i32) {
    %c0_i32 = arith.constant 0 : i32
    %c0_i32_0 = arith.constant 0 : i32
    %c0_i32_1 = arith.constant 0 : i32
    return %c0_i32, %c0_i32_0 : i32, i32
  }
  func.func @transform_3(%arg0: i32) -> (i32, i32) {
    %c0_i32 = arith.constant 0 : i32
    %c0_i32_0 = arith.constant 0 : i32
    %c0_i32_1 = arith.constant 0 : i32
    return %c0_i32, %c0_i32_0 : i32, i32
  }
  func.func @transform_4(%arg0: i32) -> (i32, i32) {
    %c0_i32 = arith.constant 0 : i32
    %c0_i32_0 = arith.constant 0 : i32
    %c0_i32_1 = arith.constant 0 : i32
    return %c0_i32, %c0_i32_0 : i32, i32
  }
  func.func @transform_5(%arg0: i32) -> (i32, i32) {
    %c0_i32 = arith.constant 0 : i32
    %c0_i32_0 = arith.constant 0 : i32
    %c0_i32_1 = arith.constant 0 : i32
    return %c0_i32, %c0_i32_0 : i32, i32
  }
  func.func @transform_6(%arg0: i32) -> (i32, i32) {
    %c0_i32 = arith.constant 0 : i32
    %c0_i32_0 = arith.constant 0 : i32
    %c0_i32_1 = arith.constant 0 : i32
    return %c0_i32, %c0_i32_0 : i32, i32
  }
  func.func @transform_7(%arg0: i32) -> (i32, i32) {
    %c0_i32 = arith.constant 0 : i32
    %c0_i32_0 = arith.constant 0 : i32
    %c0_i32_1 = arith.constant 0 : i32
    return %c0_i32, %c0_i32_0 : i32, i32
  }
  func.func @transform_8(%arg0: i32) -> (i32, i32, i32) {
    %c0_i32 = arith.constant 0 : i32
    %c0_i32_0 = arith.constant 0 : i32
    %c0_i32_1 = arith.constant 0 : i32
    return %arg0, %c0_i32, %c0_i32_0 : i32, i32, i32
  }
}

</mosaic_0001>

<llo_original>
// kernel: tpu_custom_call.1
$region0: #{tpu_custom_call.1}
  #allocation0 [shape = 'u32[]', space=smem, size = 0x4, offset = 0x4, fixed_abs, tag = 'smem constant byte address 0x4 - core index']
  #allocation1 [shape = 'u32[72,128]{1,0:T(1,128)}', space=vmem, size = 0x9000, scoped, tag = 'internal scratch']
  %s0 = inlined_call_operand.vmem [shape: bf16[2,8,8], index: 0, kind: input, shape index: {}]
  %s1 = inlined_call_operand.vmem [shape: f32[2,1,32], index: 1, kind: input, shape index: {}]
  %s2 = inlined_call_operand.vmem [shape: bf16[8,8], index: 2, kind: input, shape index: {}]
  %s3 = inlined_call_operand.vmem [shape: f32[8,32], index: 3, kind: input, shape index: {}]
  %s4 = inlined_call_operand.vmem [shape: bf16[72,32], index: 4, kind: input, shape index: {}]
  %s5 = inlined_call_operand.vmem [shape: bf16[64,32], index: 5, kind: input, shape index: {}]
  %s6 = inlined_call_operand.vmem [shape: f32[2,32], index: 6, kind: input, shape index: {}]
  %s7 = inlined_call_operand.vmem [shape: f32[3,32], index: 7, kind: input, shape index: {}]
  %s8 = inlined_call_operand.vmem [shape: f32[2,9,1], index: 8, kind: output, shape index: {}]
  %s9 = sld [smem:[#allocation0]]
  $region65: #{tpu_custom_call.1} parent=0
    _
  %s11 = ssub.s32 1, %s9
  %s12 = scalar_select 0, %s11, %s9
  loop: start=0, step=1, limit=4
  $region2: #{tpu_custom_call.1} parent=0 // loop_pre_header
    _
  $region3: #{tpu_custom_call.1} parent=0 // loop_header
    %s14 = sphi 0, %s18
    %p15 = scmp.ge.s32.totalorder %s14, 4
    %s24 = sphi 0, %s26
    %s27 = sphi 0, %s24
    %s28 = sphi 0, %s27
    %s44 = sphi 0, %s28
    %s50 = sphi 0, %s52
    %s53 = sphi 0, %s50
    %s54 = sphi 0, %s53
    %s70 = sphi 0, %s54
    %s74 = sphi 0, %s74
    %s76 = sphi 0, %s74
    %s77 = sphi 0, %s76
    %s91 = sphi 0, %s77
    %s95 = sphi 0, %s95
    %s97 = sphi 0, %s95
    %s98 = sphi 0, %s97
    %s112 = sphi 0, %s98
    %s116 = sphi 0, %s116
    %s118 = sphi 0, %s116
    %s119 = sphi 0, %s118
    %s133 = sphi 0, %s119
    %s137 = sphi 0, %s137
    %s139 = sphi 0, %s137
    %s140 = sphi 0, %s139
    %s154 = sphi 0, %s140
    %s158 = sphi 0, %s158
    %s160 = sphi 0, %s158
    %s161 = sphi 0, %s160
    %s175 = sphi 0, %s161
    %s179 = sphi 0, %s179
    %s181 = sphi 0, %s179
    %s182 = sphi 0, %s181
    %s196 = sphi 0, %s182
    %s202 = sphi 0, %s204
    %s205 = sphi 0, %s202
    %s206 = sphi 0, %s205
    %s222 = sphi 0, %s206
  $region4: #{tpu_custom_call.1} parent=0 // loop_header_branch
    %17 = sbr.rel (%p15) target = $region8
  $region5: #{tpu_custom_call.1} parent=0 // loop_body
    %s19 = ssub.s32 %s14, 1
    %s20 = ssub.s32 %s14, 2
    %s21 = sadd.s32 %s14, 1
    %s22 = ssub.s32 %s14, %s21
    %p23 = scmp.eq.s32.totalorder %s22, 0
    %s25 = sadd.s32 %s24, 1
    %s26 = scalar_select %p23, %s24, %s25
    %p29 = pneg %p23
    %p30 = scmp.eq.s32.totalorder %s14, 1
    %p31 = por %p29, %p30
    %p32 = scmp.ne.s32.totalorder %s24, %s27
    %p33 = scmp.eq.s32.totalorder %s14, 0
    %p34 = por %p32, %p33
    %p35 = scmp.ne.s32.totalorder %s24, %s27
    %p36 = scmp.eq.s32.totalorder %s19, 1
    %p37 = por %p35, %p36
    %p38 = scmp.ne.s32.totalorder %s27, %s28
    %p39 = scmp.eq.s32.totalorder %s19, 0
    %p40 = por %p38, %p39
    %p41 = scmp.ne.s32.totalorder %s27, %s28
    %p42 = scmp.eq.s32.totalorder %s20, 1
    %p43 = por %p41, %p42
    %p45 = scmp.ne.s32.totalorder %s28, %s44
    %p46 = scmp.eq.s32.totalorder %s20, 0
    %p47 = por %p45, %p46
    %s48 = ssub.s32 %s14, %s21
    %p49 = scmp.eq.s32.totalorder %s48, 0
    %s51 = sadd.s32 %s50, 1
    %s52 = scalar_select %p49, %s50, %s51
    %p55 = pneg %p49
    %p56 = scmp.eq.s32.totalorder %s14, 1
    %p57 = por %p55, %p56
    %p58 = scmp.ne.s32.totalorder %s50, %s53
    %p59 = scmp.eq.s32.totalorder %s14, 0
    %p60 = por %p58, %p59
    %p61 = scmp.ne.s32.totalorder %s50, %s53
    %p62 = scmp.eq.s32.totalorder %s19, 1
    %p63 = por %p61, %p62
    %p64 = scmp.ne.s32.totalorder %s53, %s54
    %p65 = scmp.eq.s32.totalorder %s19, 0
    %p66 = por %p64, %p65
    %p67 = scmp.ne.s32.totalorder %s53, %s54
    %p68 = scmp.eq.s32.totalorder %s20, 1
    %p69 = por %p67, %p68
    %p71 = scmp.ne.s32.totalorder %s54, %s70
    %p72 = scmp.eq.s32.totalorder %s20, 0
    %p73 = por %p71, %p72
    %s75 = sadd.s32 %s74, 1
    %p78 = scmp.eq.s32.totalorder %s14, 1
    %p79 = scmp.ne.s32.totalorder %s74, %s76
    %p80 = scmp.eq.s32.totalorder %s14, 0
    %p81 = por %p79, %p80
    %p82 = scmp.ne.s32.totalorder %s74, %s76
    %p83 = scmp.eq.s32.totalorder %s19, 1
    %p84 = por %p82, %p83
    %p85 = scmp.ne.s32.totalorder %s76, %s77
    %p86 = scmp.eq.s32.totalorder %s19, 0
    %p87 = por %p85, %p86
    %p88 = scmp.ne.s32.totalorder %s76, %s77
    %p89 = scmp.eq.s32.totalorder %s20, 1
    %p90 = por %p88, %p89
    %p92 = scmp.ne.s32.totalorder %s77, %s91
    %p93 = scmp.eq.s32.totalorder %s20, 0
    %p94 = por %p92, %p93
    %s96 = sadd.s32 %s95, 1
    %p99 = scmp.eq.s32.totalorder %s14, 1
    %p100 = scmp.ne.s32.totalorder %s95, %s97
    %p101 = scmp.eq.s32.totalorder %s14, 0
    %p102 = por %p100, %p101
    %p103 = scmp.ne.s32.totalorder %s95, %s97
    %p104 = scmp.eq.s32.totalorder %s19, 1
    %p105 = por %p103, %p104
    %p106 = scmp.ne.s32.totalorder %s97, %s98
    %p107 = scmp.eq.s32.totalorder %s19, 0
    %p108 = por %p106, %p107
    %p109 = scmp.ne.s32.totalorder %s97, %s98
    %p110 = scmp.eq.s32.totalorder %s20, 1
    %p111 = por %p109, %p110
    %p113 = scmp.ne.s32.totalorder %s98, %s112
    %p114 = scmp.eq.s32.totalorder %s20, 0
    %p115 = por %p113, %p114
    %s117 = sadd.s32 %s116, 1
    %p120 = scmp.eq.s32.totalorder %s14, 1
    %p121 = scmp.ne.s32.totalorder %s116, %s118
    %p122 = scmp.eq.s32.totalorder %s14, 0
    %p123 = por %p121, %p122
    %p124 = scmp.ne.s32.totalorder %s116, %s118
    %p125 = scmp.eq.s32.totalorder %s19, 1
    %p126 = por %p124, %p125
    %p127 = scmp.ne.s32.totalorder %s118, %s119
    %p128 = scmp.eq.s32.totalorder %s19, 0
    %p129 = por %p127, %p128
    %p130 = scmp.ne.s32.totalorder %s118, %s119
    %p131 = scmp.eq.s32.totalorder %s20, 1
    %p132 = por %p130, %p131
    %p134 = scmp.ne.s32.totalorder %s119, %s133
    %p135 = scmp.eq.s32.totalorder %s20, 0
    %p136 = por %p134, %p135
    %s138 = sadd.s32 %s137, 1
    %p141 = scmp.eq.s32.totalorder %s14, 1
    %p142 = scmp.ne.s32.totalorder %s137, %s139
    %p143 = scmp.eq.s32.totalorder %s14, 0
    %p144 = por %p142, %p143
    %p145 = scmp.ne.s32.totalorder %s137, %s139
    %p146 = scmp.eq.s32.totalorder %s19, 1
    %p147 = por %p145, %p146
    %p148 = scmp.ne.s32.totalorder %s139, %s140
    %p149 = scmp.eq.s32.totalorder %s19, 0
    %p150 = por %p148, %p149
    %p151 = scmp.ne.s32.totalorder %s139, %s140
    %p152 = scmp.eq.s32.totalorder %s20, 1
    %p153 = por %p151, %p152
    %p155 = scmp.ne.s32.totalorder %s140, %s154
    %p156 = scmp.eq.s32.totalorder %s20, 0
    %p157 = por %p155, %p156
    %s159 = sadd.s32 %s158, 1
    %p162 = scmp.eq.s32.totalorder %s14, 1
    %p163 = scmp.ne.s32.totalorder %s158, %s160
    %p164 = scmp.eq.s32.totalorder %s14, 0
    %p165 = por %p163, %p164
    %p166 = scmp.ne.s32.totalorder %s158, %s160
    %p167 = scmp.eq.s32.totalorder %s19, 1
    %p168 = por %p166, %p167
    %p169 = scmp.ne.s32.totalorder %s160, %s161
    %p170 = scmp.eq.s32.totalorder %s19, 0
    %p171 = por %p169, %p170
    %p172 = scmp.ne.s32.totalorder %s160, %s161
    %p173 = scmp.eq.s32.totalorder %s20, 1
    %p174 = por %p172, %p173
    %p176 = scmp.ne.s32.totalorder %s161, %s175
    %p177 = scmp.eq.s32.totalorder %s20, 0
    %p178 = por %p176, %p177
    %s180 = sadd.s32 %s179, 1
    %p183 = scmp.eq.s32.totalorder %s14, 1
    %p184 = scmp.ne.s32.totalorder %s179, %s181
    %p185 = scmp.eq.s32.totalorder %s14, 0
    %p186 = por %p184, %p185
    %p187 = scmp.ne.s32.totalorder %s179, %s181
    %p188 = scmp.eq.s32.totalorder %s19, 1
    %p189 = por %p187, %p188
    %p190 = scmp.ne.s32.totalorder %s181, %s182
    %p191 = scmp.eq.s32.totalorder %s19, 0
    %p192 = por %p190, %p191
    %p193 = scmp.ne.s32.totalorder %s181, %s182
    %p194 = scmp.eq.s32.totalorder %s20, 1
    %p195 = por %p193, %p194
    %p197 = scmp.ne.s32.totalorder %s182, %s196
    %p198 = scmp.eq.s32.totalorder %s20, 0
    %p199 = por %p197, %p198
    %s200 = ssub.s32 %s14, %s21
    %p201 = scmp.eq.s32.totalorder %s200, 0
    %s203 = sadd.s32 %s202, 1
    %s204 = scalar_select %p201, %s202, %s203
    %p207 = pneg %p201
    %p208 = scmp.eq.s32.totalorder %s14, 1
    %p209 = por %p207, %p208
    %p210 = scmp.ne.s32.totalorder %s202, %s205
    %p211 = scmp.eq.s32.totalorder %s14, 0
    %p212 = por %p210, %p211
    %p213 = scmp.ne.s32.totalorder %s202, %s205
    %p214 = scmp.eq.s32.totalorder %s19, 1
    %p215 = por %p213, %p214
    %p216 = scmp.ne.s32.totalorder %s205, %s206
    %p217 = scmp.eq.s32.totalorder %s19, 0
    %p218 = por %p216, %p217
    %p219 = scmp.ne.s32.totalorder %s205, %s206
    %p220 = scmp.eq.s32.totalorder %s20, 1
    %p221 = por %p219, %p220
    %p223 = scmp.ne.s32.totalorder %s206, %s222
    %p224 = scmp.eq.s32.totalorder %s20, 0
    %p225 = por %p223, %p224
    %p226 = scmp.le.s32.totalorder 1, %s14
    %p227 = scmp.lt.s32.totalorder %s14, 3
    %p228 = pnand %p226, %p227
    %p229 = pneg %p228
    // Predicated region
    $region9: #{tpu_custom_call.1} parent=5 // pred_check
      _
    $region10: #{tpu_custom_call.1} parent=5 // pred_check_branch
      %231 = sbr.rel (%p228) target = $region12
    $region11: #{tpu_custom_call.1} parent=5 // pred_region
      %s232 = ssub.s32 %s14, 1
      // Predicated region
      $region13: #{tpu_custom_call.1} parent=11 // pred_check
        %p233 = pneg %p87
      $region14: #{tpu_custom_call.1} parent=11 // pred_check_branch
        %235 = sbr.rel (%p233) target = $region16
      $region15: #{tpu_custom_call.1} parent=11 // pred_region
        _
      $region16: #{tpu_custom_call.1} parent=11 // pred_fallthru
        _
      // Predicated region
      $region17: #{tpu_custom_call.1} parent=11 // pred_check
        %p236 = pneg %p108
      $region18: #{tpu_custom_call.1} parent=11 // pred_check_branch
        %238 = sbr.rel (%p236) target = $region20
      $region19: #{tpu_custom_call.1} parent=11 // pred_region
        _
      $region20: #{tpu_custom_call.1} parent=11 // pred_fallthru
        _
      // Predicated region
      $region21: #{tpu_custom_call.1} parent=11 // pred_check
        %p239 = pneg %p129
      $region22: #{tpu_custom_call.1} parent=11 // pred_check_branch
        %241 = sbr.rel (%p239) target = $region24
      $region23: #{tpu_custom_call.1} parent=11 // pred_region
        _
      $region24: #{tpu_custom_call.1} parent=11 // pred_fallthru
        _
      // Predicated region
      $region25: #{tpu_custom_call.1} parent=11 // pred_check
        %p242 = pneg %p150
      $region26: #{tpu_custom_call.1} parent=11 // pred_check_branch
        %244 = sbr.rel (%p242) target = $region28
      $region27: #{tpu_custom_call.1} parent=11 // pred_region
        _
      $region28: #{tpu_custom_call.1} parent=11 // pred_fallthru
        _
      // Predicated region
      $region29: #{tpu_custom_call.1} parent=11 // pred_check
        %p245 = pneg %p171
      $region30: #{tpu_custom_call.1} parent=11 // pred_check_branch
        %247 = sbr.rel (%p245) target = $region32
      $region31: #{tpu_custom_call.1} parent=11 // pred_region
        _
      $region32: #{tpu_custom_call.1} parent=11 // pred_fallthru
        _
      // Predicated region
      $region33: #{tpu_custom_call.1} parent=11 // pred_check
        %p248 = pneg %p192
      $region34: #{tpu_custom_call.1} parent=11 // pred_check_branch
        %250 = sbr.rel (%p248) target = $region36
      $region35: #{tpu_custom_call.1} parent=11 // pred_region
        _
      $region36: #{tpu_custom_call.1} parent=11 // pred_fallthru
        _
    $region12: #{tpu_custom_call.1} parent=5 // pred_fallthru
      _
    %p251 = scmp.lt.s32.totalorder %s14, 2
    // Predicated region
    $region37: #{tpu_custom_call.1} parent=5 // pred_check
      %p252 = pneg %p251
    $region38: #{tpu_custom_call.1} parent=5 // pred_check_branch
      %254 = sbr.rel (%p252) target = $region40
    $region39: #{tpu_custom_call.1} parent=5 // pred_region
      // Predicated region
      $region41: #{tpu_custom_call.1} parent=39 // pred_check
        %p255 = pneg %p34
      $region42: #{tpu_custom_call.1} parent=39 // pred_check_branch
        %257 = sbr.rel (%p255) target = $region44
      $region43: #{tpu_custom_call.1} parent=39 // pred_region
        %p258 = scmp.lt.s32.totalorder %s14, 1
        %s259 = scalar_select %p258, %s14, 1
        %s260 = smul.addr %s259, 4
        %s261 = scalar_lea.vmem %s0, %s260
      $region44: #{tpu_custom_call.1} parent=39 // pred_fallthru
        _
      // Predicated region
      $region45: #{tpu_custom_call.1} parent=39 // pred_check
        %p262 = pneg %p60
      $region46: #{tpu_custom_call.1} parent=39 // pred_check_branch
        %264 = sbr.rel (%p262) target = $region48
      $region47: #{tpu_custom_call.1} parent=39 // pred_region
        %p265 = scmp.lt.s32.totalorder %s14, 1
        %s266 = scalar_select %p265, %s14, 1
        %s267 = scalar_lea.vmem %s1, %s266
      $region48: #{tpu_custom_call.1} parent=39 // pred_fallthru
        _
    $region40: #{tpu_custom_call.1} parent=5 // pred_fallthru
      _
    %p268 = scmp.le.s32.totalorder 1, %s14
    %p269 = scmp.lt.s32.totalorder %s14, 3
    %p270 = pnand %p268, %p269
    %p271 = pneg %p270
    // Predicated region
    $region49: #{tpu_custom_call.1} parent=5 // pred_check
      _
    $region50: #{tpu_custom_call.1} parent=5 // pred_check_branch
      %273 = sbr.rel (%p270) target = $region52
    $region51: #{tpu_custom_call.1} parent=5 // pred_region
      %s274 = ssub.s32 %s14, 1
      %p275 = scmp.lt.s32.totalorder %s19, 1
      %s276 = scalar_select %p275, %s19, 1
      %s277 = smul.addr %s276, 4
      %s278 = scalar_lea.vmem %s0, %s277
      %p279 = pneg %p40
      %p280 = pneg %p37
      %p281 = scmp.lt.s32.totalorder %s19, 1
      %s282 = scalar_select %p281, %s19, 1
      %s283 = scalar_lea.vmem %s1, %s282
      %p284 = pneg %p66
      %p285 = pneg %p63
      %p286 = pneg %p87
      %p287 = pneg %p84
      %p288 = pneg %p108
      %p289 = pneg %p105
      %p290 = pneg %p129
      %p291 = pneg %p126
      %p292 = pneg %p150
      %p293 = pneg %p147
      %p294 = pneg %p171
      %p295 = pneg %p168
      %p296 = pneg %p192
      %p297 = pneg %p189
      %p298 = pneg %p218
      %p299 = pneg %p215
      %p300 = scmp.lt.s32.totalorder %s19, 1
      %s301 = scalar_select %p300, %s19, 1
      %s302 = smul.addr %s301, 2
      %s303 = smul.addr %s302, 8
      %s304 = scalar_lea.vmem %s8, %s303
      %p305 = scmp.lt.s32.totalorder %s19, 1
      %s306 = scalar_select %p305, %s19, 1
      %s307 = smul.addr %s306, 4
      %s308 = scalar_lea.vmem %s0, %s307
      %p309 = scmp.lt.s32.totalorder %s19, 1
      %s310 = scalar_select %p309, %s19, 1
      %s311 = scalar_lea.vmem %s1, %s310
      %p312 = scmp.lt.s32.totalorder %s19, 1
      %s313 = scalar_select %p312, %s19, 1
      %s314 = smul.addr %s313, 2
      %s315 = smul.addr %s314, 8
      %s316 = scalar_lea.vmem %s8, %s315
      %v318 = vld [vmem:[%s4] sm:$0xf]
      %v319 = vld [vmem:[%s4 + $0x4] sm:$0xf]
      %v320 = vld [vmem:[%s4 + $0x8] sm:$0xf]
      %v321 = vld [vmem:[%s4 + $0xc] sm:$0xf]
      %v322 = vld [vmem:[%s4 + $0x10] sm:$0xf]
      %v323 = vld [vmem:[%s4 + $0x14] sm:$0xf]
      %v324 = vld [vmem:[%s4 + $0x18] sm:$0xf]
      %v325 = vld [vmem:[%s4 + $0x1c] sm:$0xf]
      %v326 = vld [vmem:[%s4 + $0x20] sm:$0xf]
      %v327 = vld [vmem:[%s5] sm:$0xf]
      %v328 = vld [vmem:[%s5 + $0x4] sm:$0xf]
      %v329 = vld [vmem:[%s5 + $0x8] sm:$0xf]
      %v330 = vld [vmem:[%s5 + $0xc] sm:$0xf]
      %v331 = vld [vmem:[%s5 + $0x10] sm:$0xf]
      %v332 = vld [vmem:[%s5 + $0x14] sm:$0xf]
      %v333 = vld [vmem:[%s5 + $0x18] sm:$0xf]
      %v334 = vld [vmem:[%s5 + $0x1c] sm:$0xf]
      %v335 = vld [vmem:[%s6] sm:$0x1]
      %v336 = vld [vmem:[%s6 + $0x1] sm:$0x1]
      %v337 = vld [vmem:[%s7] sm:$0x1]
      %v338 = vld [vmem:[%s7 + $0x1] sm:$0x1]
      %v339 = vld [vmem:[%s7 + $0x2] sm:$0x1]
      %v340 = vld [vmem:[%s308] sm:$0xf]
      %v341 = vld [vmem:[%s2] sm:$0xf]
      %vm342 = vcmask 64512
      %v344 = vsel %vm342, %v340, 0
      %vm346 = vcmask 1043456
      %v348 = vsel %vm346, %v318, 0
      %350 = vmatpush.bf16.msra.mxu0 0
      %351 = vmatpush.bf16.msra.mxu0 0
      %352 = vmatpush.bf16.msra.mxu0 0
      %353 = vmatpush.bf16.msra.mxu0 0
      %354 = vmatpush.bf16.msra.mxu0 0
      %355 = vmatpush.bf16.msra.mxu0 0
      %356 = vmatpush.bf16.msra.mxu0 0
      %357 = vmatpush.bf16.msra.mxu0 %v348
      %358 = vmatmul.bf16.gmra.mxu0 %v344
      %v359 = vpop.f32.mrf.mxu0
      %v360 = vadd.f32 0.0, %v359
      %v361 = vpop.f32.mrf.mxu0
      %362 = vdwg.mxu0
      %v363 = vmax.f32 %v360, 0.0
      %v364 = vld [vmem:[%s3] sm:$0xff]
      %v365 = vadd.f32 %v363, %v364
      %v366 = vperm.slane %v335, 0
      %v367 = vadd.f32 %v365, %v366
      %v368 = vpack.c.bf16 %v363, %v363
      %v370 = vsel %vm342, %v341, 0
      %v373 = vsel %vm346, %v368, 0
      %375 = vmatpush.bf16.msra.mxu0 0
      %376 = vmatpush.bf16.msra.mxu0 0
      %377 = vmatpush.bf16.msra.mxu0 0
      %378 = vmatpush.bf16.msra.mxu0 0
      %379 = vmatpush.bf16.msra.mxu0 0
      %380 = vmatpush.bf16.msra.mxu0 0
      %381 = vmatpush.bf16.msra.mxu0 0
      %382 = vmatpush.bf16.msra.mxu0 %v373
      %383 = vmatmul.bf16.gmra.mxu0 %v370
      %v384 = vpop.f32.mrf.mxu0
      %v385 = vadd.f32 0.0, %v384
      %v386 = vpop.f32.mrf.mxu0
      %387 = vdwg.mxu0
      %v388 = vpack.c.bf16 %v385, %v385
      %v393 = vunpack.c.l.b16 %v319
      %v394 = vunpack.c.l.b16 %v320
      %v395 = vunpack.c.l.b16 %v321
      %v396 = vunpack.c.l.b16 %v322
      %v397 = vpack.c.b16 %v394, %v393
      %v398 = vpack.c.b16 %v396, %v395
      %vm401 = vcmask 261120
      %v403 = vsel %vm401, %v388, 0
      %405 = vmatpush.bf16.msra.mxu0 0
      %406 = vmatpush.bf16.msra.mxu0 0
      %407 = vmatpush.bf16.msra.mxu0 0
      %408 = vmatpush.bf16.msra.mxu0 0
      %409 = vmatpush.bf16.msra.mxu0 0
      %410 = vmatpush.bf16.msra.mxu0 0
      %411 = vmatpush.bf16.msra.mxu0 %v398
      %412 = vmatpush.bf16.msra.mxu0 %v397
      %413 = vmatmul.bf16.gmra.mxu0 %v403
      %v414 = vpop.f32.mrf.mxu0
      %v415 = vadd.f32 %v367, %v414
      %v416 = vpop.f32.mrf.mxu0
      %417 = vdwg.mxu0
      %v418 = vmax.f32 %v415, 0.0
      %v419 = vpack.c.bf16 %v418, %v418
      %v421 = vsel %vm346, %v419, 0
      %423 = vmatpush.bf16.msra.mxu0 0
      %424 = vmatpush.bf16.msra.mxu0 0
      %425 = vmatpush.bf16.msra.mxu0 0
      %426 = vmatpush.bf16.msra.mxu0 0
      %427 = vmatpush.bf16.msra.mxu0 0
      %428 = vmatpush.bf16.msra.mxu0 0
      %429 = vmatpush.bf16.msra.mxu0 0
      %430 = vmatpush.bf16.msra.mxu0 %v421
      %431 = vmatmul.bf16.gmra.mxu0 %v370
      %v432 = vpop.f32.mrf.mxu0
      %v433 = vadd.f32 0.0, %v432
      %v434 = vpop.f32.mrf.mxu0
      %435 = vdwg.mxu0
      %v436 = vpack.c.bf16 %v433, %v433
      %v438 = vsel %vm401, %v436, 0
      %440 = vmatpush.bf16.msra.mxu0 0
      %441 = vmatpush.bf16.msra.mxu0 0
      %442 = vmatpush.bf16.msra.mxu0 0
      %443 = vmatpush.bf16.msra.mxu0 0
      %444 = vmatpush.bf16.msra.mxu0 0
      %445 = vmatpush.bf16.msra.mxu0 0
      %446 = vmatpush.bf16.msra.mxu0 %v398
      %447 = vmatpush.bf16.msra.mxu0 %v397
      %448 = vmatmul.bf16.gmra.mxu0 %v438
      %v449 = vpop.f32.mrf.mxu0
      %v450 = vadd.f32 %v367, %v449
      %v451 = vpop.f32.mrf.mxu0
      %452 = vdwg.mxu0
      %v453 = vmax.f32 %v450, 0.0
      %v454 = vpack.c.bf16 %v453, %v453
      %v456 = vsel %vm346, %v454, 0
      %458 = vmatpush.bf16.msra.mxu0 0
      %459 = vmatpush.bf16.msra.mxu0 0
      %460 = vmatpush.bf16.msra.mxu0 0
      %461 = vmatpush.bf16.msra.mxu0 0
      %462 = vmatpush.bf16.msra.mxu0 0
      %463 = vmatpush.bf16.msra.mxu0 0
      %464 = vmatpush.bf16.msra.mxu0 0
      %465 = vmatpush.bf16.msra.mxu0 %v456
      %466 = vmatmul.bf16.gmra.mxu0 %v370
      %v467 = vpop.f32.mrf.mxu0
      %v468 = vadd.f32 0.0, %v467
      %v469 = vpop.f32.mrf.mxu0
      %470 = vdwg.mxu0
      %v471 = vpack.c.bf16 %v468, %v468
      %v473 = vsel %vm401, %v471, 0
      %475 = vmatpush.bf16.msra.mxu0 0
      %476 = vmatpush.bf16.msra.mxu0 0
      %477 = vmatpush.bf16.msra.mxu0 0
      %478 = vmatpush.bf16.msra.mxu0 0
      %479 = vmatpush.bf16.msra.mxu0 0
      %480 = vmatpush.bf16.msra.mxu0 0
      %481 = vmatpush.bf16.msra.mxu0 %v398
      %482 = vmatpush.bf16.msra.mxu0 %v397
      %483 = vmatmul.bf16.gmra.mxu0 %v473
      %v484 = vpop.f32.mrf.mxu0
      %v485 = vadd.f32 %v367, %v484
      %v486 = vpop.f32.mrf.mxu0
      %487 = vdwg.mxu0
      %v488 = vmax.f32 %v485, 0.0
      %v489 = vsel %vm401, %v488, 0.0
      %v490 = vrot.slane %v489, 4
      %v491 = vadd.f32 %v489, %v490
      %v492 = vrot.slane %v491, 2
      %v493 = vadd.f32 %v491, %v492
      %v494 = vrot.slane %v493, 1
      %v495 = vadd.f32 %v493, %v494
      %v496 = vmul.f32 %v495, 0.125
      %v497 = vpack.c.bf16 %v496, %v496
      %v502 = vunpack.c.l.b16 %v323
      %v503 = vunpack.c.l.b16 %v324
      %v504 = vunpack.c.l.b16 %v325
      %v505 = vunpack.c.l.b16 %v326
      %v506 = vpack.c.b16 %v503, %v502
      %v507 = vpack.c.b16 %v505, %v504
      %v511 = vsel %vm401, %v497, 0
      %513 = vmatpush.bf16.msra.mxu0 0
      %514 = vmatpush.bf16.msra.mxu0 0
      %515 = vmatpush.bf16.msra.mxu0 0
      %516 = vmatpush.bf16.msra.mxu0 0
      %517 = vmatpush.bf16.msra.mxu0 0
      %518 = vmatpush.bf16.msra.mxu0 0
      %519 = vmatpush.bf16.msra.mxu0 %v507
      %520 = vmatpush.bf16.msra.mxu0 %v506
      %521 = vmatmul.bf16.gmra.mxu0 %v511
      %v522 = vpop.f32.mrf.mxu0
      %v523 = vadd.f32 %v336, %v522
      %v524 = vpop.f32.mrf.mxu0
      %525 = vdwg.mxu0
      %v526 = vmax.f32 %v523, 0.0
      %v527 = vld [vmem:[%s311] sm:$0x1]
      %v528 = vpack.c.bf16 %v527, %v527
      %v533 = vunpack.c.l.b16 %v331
      %v534 = vunpack.c.l.b16 %v332
      %v535 = vunpack.c.l.b16 %v333
      %v536 = vunpack.c.l.b16 %v334
      %v537 = vpack.c.b16 %v534, %v533
      %v538 = vpack.c.b16 %v536, %v535
      %v542 = vsel %vm401, %v528, 0
      %544 = vmatpush.bf16.msra.mxu0 0
      %545 = vmatpush.bf16.msra.mxu0 0
      %546 = vmatpush.bf16.msra.mxu0 0
      %547 = vmatpush.bf16.msra.mxu0 0
      %548 = vmatpush.bf16.msra.mxu0 0
      %549 = vmatpush.bf16.msra.mxu0 0
      %550 = vmatpush.bf16.msra.mxu0 %v538
      %551 = vmatpush.bf16.msra.mxu0 %v537
      %552 = vmatmul.bf16.gmra.mxu0 %v542
      %v553 = vpop.f32.mrf.mxu0
      %v554 = vadd.f32 %v337, %v553
      %v555 = vpop.f32.mrf.mxu0
      %556 = vdwg.mxu0
      %v557 = vpack.c.bf16 %v488, %v488
      %v558 = vperm.slane %v554, 0
      %v563 = vunpack.c.l.b16 %v327
      %v564 = vunpack.c.l.b16 %v328
      %v565 = vunpack.c.l.b16 %v329
      %v566 = vunpack.c.l.b16 %v330
      %v567 = vpack.c.b16 %v564, %v563
      %v568 = vpack.c.b16 %v566, %v565
      %v572 = vsel %vm401, %v557, 0
      %574 = vmatpush.bf16.msra.mxu0 0
      %575 = vmatpush.bf16.msra.mxu0 0
      %576 = vmatpush.bf16.msra.mxu0 0
      %577 = vmatpush.bf16.msra.mxu0 0
      %578 = vmatpush.bf16.msra.mxu0 0
      %579 = vmatpush.bf16.msra.mxu0 0
      %580 = vmatpush.bf16.msra.mxu0 %v568
      %581 = vmatpush.bf16.msra.mxu0 %v567
      %582 = vmatmul.bf16.gmra.mxu0 %v572
      %v583 = vpop.f32.mrf.mxu0
      %v584 = vadd.f32 %v558, %v583
      %v585 = vpop.f32.mrf.mxu0
      %586 = vdwg.mxu0
      %v587 = vmax.f32 %v584, 0.0
      %v588 = vpack.c.bf16 %v526, %v526
      %v590 = vsel %vm401, %v588, 0
      %592 = vmatpush.bf16.msra.mxu0 0
      %593 = vmatpush.bf16.msra.mxu0 0
      %594 = vmatpush.bf16.msra.mxu0 0
      %595 = vmatpush.bf16.msra.mxu0 0
      %596 = vmatpush.bf16.msra.mxu0 0
      %597 = vmatpush.bf16.msra.mxu0 0
      %598 = vmatpush.bf16.msra.mxu0 %v568
      %599 = vmatpush.bf16.msra.mxu0 %v567
      %600 = vmatmul.bf16.gmra.mxu0 %v590
      %v601 = vpop.f32.mrf.mxu0
      %v602 = vadd.f32 %v554, %v601
      %v603 = vpop.f32.mrf.mxu0
      %604 = vdwg.mxu0
      %v605 = vmax.f32 %v602, 0.0
      %v606 = vperm.slane %v338, 0
      %v607 = vmul.f32 %v587, %v606
      %v608 = vsel %vm401, %v607, 0.0
      %609 = vadd.xlane.f32.xlu0 %v608
      %v610 = vpop.xlane.xlu0 %609
      %v611 = vperm.slane %v339, 0
      %v612 = vadd.f32 %v610, %v611
      %v613 = vmul.f32 %v605, %v338
      %vm614 = vcmask 253952
      %v615 = vsel %vm614, %v613, 0.0
      %616 = vadd.xlane.f32.xlu0 %v615
      %v617 = vpop.xlane.xlu0 %616
      %v618 = vadd.f32 %v617, %v339
      %vm619 = vcmask 7168
      %620 = vst.msk [vmem:[%s316] sm:$0xff] %vm619, %v612
      %vm621 = vcmask 0
      %622 = vst.msk [vmem:[%s316 + $0x8] sm:$0x1] %vm621, %v618
      %p623 = scmp.lt.s32.totalorder %s19, 1
      %s624 = scalar_select %p623, %s19, 1
      %s625 = smul.addr %s624, 2
      %s626 = smul.addr %s625, 8
      %s627 = scalar_lea.vmem %s8, %s626
      // Predicated region
      $region53: #{tpu_custom_call.1} parent=51 // pred_check
        %p628 = pneg %p215
      $region54: #{tpu_custom_call.1} parent=51 // pred_check_branch
        %630 = sbr.rel (%p628) target = $region56
      $region55: #{tpu_custom_call.1} parent=51 // pred_region
        _
      $region56: #{tpu_custom_call.1} parent=51 // pred_fallthru
        _
    $region52: #{tpu_custom_call.1} parent=5 // pred_fallthru
      _
    %p631 = scmp.le.s32.totalorder 2, %s14
    // Predicated region
    $region57: #{tpu_custom_call.1} parent=5 // pred_check
      %p632 = pneg %p631
    $region58: #{tpu_custom_call.1} parent=5 // pred_check_branch
      %634 = sbr.rel (%p632) target = $region60
    $region59: #{tpu_custom_call.1} parent=5 // pred_region
      %s635 = ssub.s32 %s14, 2
      // Predicated region
      $region61: #{tpu_custom_call.1} parent=59 // pred_check
        %p636 = pneg %p221
      $region62: #{tpu_custom_call.1} parent=59 // pred_check_branch
        %638 = sbr.rel (%p636) target = $region64
      $region63: #{tpu_custom_call.1} parent=59 // pred_region
        %p639 = scmp.lt.s32.totalorder %s20, 1
        %s640 = scalar_select %p639, %s20, 1
        %s641 = smul.addr %s640, 2
        %s642 = smul.addr %s641, 8
        %s643 = scalar_lea.vmem %s8, %s642
      $region64: #{tpu_custom_call.1} parent=59 // pred_fallthru
        _
    $region60: #{tpu_custom_call.1} parent=5 // pred_fallthru
      _
  $region6: #{tpu_custom_call.1} parent=0 // loop_footer
    %s18 = sadd.s32 1, %s14
  $region7: #{tpu_custom_call.1} parent=0 // loop_footer_branch
    %13 = sbr.rel target = $region3
  $region8: #{tpu_custom_call.1} parent=0 // loop_exit
    _

</llo_original>
